<compile_context>
chip_gen: v7x
topology: tpu7x:2x2x1
jax: 0.10.0
libtpu: 0.0.40
codegen_flags: <defaults>
</compile_context>

<pallas_src>
import numpy as np

import jax
import jax.numpy as jnp
from jax.experimental import pallas as pl
from jax.experimental.pallas import tpu as pltpu

# ----------------------------------------------------------------------------- constants
BATCH_SIZE = 2
BIN_MAX_COUNT = 30          # ENV.BIN_MAX_COUNT
BIN_N_STATE = 3
EMBEDDING_DIM = 32          # AGENT.EMBEDDING_DIM
ROW_COUNT = 16              # ENV.ROW_COUNT (assumed; see TODO above)
COL_COUNT = 16              # ENV.COL_COUNT
PALLET_CHANNELS = 2         # conv1 = Conv2d(2, 4, ...)
BN_EPS = 1e-5
BIN_IN = BIN_MAX_COUNT * BIN_N_STATE            # 90


def conv2d_size_out(size, kernel_size=5, stride=2):
    return (size - (kernel_size - 1) - 1) // stride + 1


OH1 = conv2d_size_out(ROW_COUNT, 5, 2)          # 6
OW1 = conv2d_size_out(COL_COUNT, 5, 2)          # 6
OH2 = conv2d_size_out(OH1, 3, 2)                # 2
OW2 = conv2d_size_out(OW1, 3, 2)                # 2
OH3 = conv2d_size_out(OH2, 2, 2)                # 1
OW3 = conv2d_size_out(OW2, 2, 2)                # 1
CONV_H, CONV_W = OH3, OW3
assert CONV_H >= 1 and CONV_W >= 1

C1_COLS = 4 * OH1 * OW1                         # 144  (conv1 dense out width)
C2_COLS = 8 * OH2 * OW2                         # 32
C3_COLS = 8 * OH3 * OW3                         # 8
LINEAR3_IN = CONV_H * CONV_W * 8 + EMBEDDING_DIM


def _round_up(x, m):
    return ((x + m - 1) // m) * m


# ----------------------------------------------------------------------------- slab layouts (static)
# Small matmul weights, packed row-wise into one bf16 slab (offsets aligned to
# 16 rows so every slice is bf16-sublane aligned).  d_c1 stays separate.
_W_ENTRIES = (
    ("w_l1", BIN_IN, EMBEDDING_DIM),
    ("w_l2", EMBEDDING_DIM, EMBEDDING_DIM),
    ("d_c2", C1_COLS, C2_COLS),
    ("d_c3", C2_COLS, C3_COLS),
    ("w_l3a", EMBEDDING_DIM, BIN_MAX_COUNT),
    ("w_l3b", C3_COLS, BIN_MAX_COUNT),
)
W_SLAB_COLS = max(c for _, _, c in _W_ENTRIES)                  # 32
W_SLAB_LAYOUT = {}
_off = 0
for _name, _rows, _cols in _W_ENTRIES:
    W_SLAB_LAYOUT[_name] = (_off, _rows, _cols)
    _off = _round_up(_off + _rows, 16)
W_SLAB_ROWS = _off                                              # 352

# All biases packed into one f32 slab, one bias per row.
_B_ENTRIES = (
    ("b_l1", EMBEDDING_DIM),
    ("b_l2", EMBEDDING_DIM),
    ("b_c1", C1_COLS),
    ("b_c2", C2_COLS),
    ("b_c3", C3_COLS),
    ("b_l3", BIN_MAX_COUNT),
)
B_SLAB_COLS = max(c for _, c in _B_ENTRIES)                     # 144
B_SLAB_LAYOUT = {name: (i, cols) for i, (name, cols) in enumerate(_B_ENTRIES)}
B_SLAB_ROWS = _round_up(len(_B_ENTRIES), 8)                     # 8


# ----------------------------------------------------------------------------- fused Pallas kernel
def _dqn_fused_kernel(bin_ref, pallet_ref, dc1_ref, wslab_ref, bslab_ref, o_ref):
    """Entire DQN forward: every layer is a (pre-folded) dense matmul + ReLU.

    Weights come from two packed slabs (bf16 weights, f32 biases) plus the
    big conv1 dense matrix; matmuls run bf16 x bf16 -> f32 on the MXU and all
    elementwise work stays f32.
    """
    f32 = jnp.float32
    bf16 = jnp.bfloat16

    def wget(name):
        off, rows, cols = W_SLAB_LAYOUT[name]
        return wslab_ref[off:off + rows, :cols]          # static slice (view)

    def bget(name):
        row, cols = B_SLAB_LAYOUT[name]
        return bslab_ref[row:row + 1, :cols]

    def dense(x, w, b, relu=True):
        y = jnp.dot(x.astype(bf16), w, preferred_element_type=f32) + b
        return jnp.maximum(y, 0.0) if relu else y

    # bin branch: linear1 -> relu -> linear2 -> relu
    x1 = dense(bin_ref[...], wget("w_l1"), bget("b_l1"))
    x1 = dense(x1, wget("w_l2"), bget("b_l2"))

    # pallet branch: (conv1+bn1), (conv2+bn2), (conv3+bn3) as dense matmuls + relu
    x2 = dense(pallet_ref[...], dc1_ref[...], bget("b_c1"))
    x2 = dense(x2, wget("d_c2"), bget("b_c2"))
    x2 = dense(x2, wget("d_c3"), bget("b_c3"))

    # linear3 over cat([x1, x2]) -- split weight avoids an in-kernel concat.
    y = (jnp.dot(x1.astype(bf16), wget("w_l3a"), preferred_element_type=f32)
         + jnp.dot(x2.astype(bf16), wget("w_l3b"), preferred_element_type=f32)
         + bget("b_l3"))
    o_ref[...] = y.astype(o_ref.dtype)


@jax.jit
def dqn_forward(packed_params, bin_info, pallet_info):
    # Replicate the PyTorch forward's shape handling.
    if bin_info.ndim != 3:
        bin_x = bin_info.reshape(1, -1)
    else:
        bin_x = bin_info.reshape(bin_info.shape[0], BIN_IN)
    if pallet_info.ndim != 4:
        pallet_info = pallet_info[None]
    B = bin_x.shape[0]
    # NHWC flatten only -- the NHWC->NCHW permute is folded into d_c1.
    pallet_x = pallet_info.reshape(B, ROW_COUNT * COL_COUNT * PALLET_CHANNELS)

    args = (bin_x.astype(jnp.float32),
            pallet_x.astype(jnp.float32),
            packed_params["d_c1"],
            packed_params["w_slab"],
            packed_params["b_slab"])

    return pl.pallas_call(
        _dqn_fused_kernel,
        out_shape=jax.ShapeDtypeStruct((B, BIN_MAX_COUNT), jnp.float32),
        in_specs=[pl.BlockSpec(memory_space=pltpu.MemorySpace.VMEM)
                  for _ in args],
        out_specs=pl.BlockSpec(memory_space=pltpu.MemorySpace.VMEM),
    )(*args)


# ----------------------------------------------------------------------------- parameter prep (host-side, once)
def _fold_bn_into_conv(w, b, bn):
    """Eval-mode BN folded into the preceding conv: y = conv(x)*scale + shift."""
    scale = np.asarray(bn["gamma"], np.float32) / np.sqrt(np.asarray(bn["var"], np.float32) + BN_EPS)
    shift = np.asarray(bn["beta"], np.float32) - np.asarray(bn["mean"], np.float32) * scale
    w = np.asarray(w, np.float32) * scale[:, None, None, None]
    b = np.asarray(b, np.float32) * scale + shift
    return w.astype(np.float32), b.astype(np.float32)


def _conv2d_as_dense(w, b, H, W, stride, nhwc_input=False):
    """Lower a VALID Conv2d (PyTorch OIHW weights) to a dense (Cin*H*W, Cout*OH*OW) matrix.

    Input flattening:  NHWC ((ih*W+iw)*Cin+ci) if nhwc_input else NCHW ((ci*H+ih)*W+iw).
    Output flattening: NCHW ((co*OH+oh)*OW+ow)  -- matches torch.flatten of NCHW.
    """
    Cout, Cin, KH, KW = w.shape
    OH = (H - KH) // stride + 1
    OW = (W - KW) // stride + 1
    dense = np.zeros((Cin * H * W, Cout * OH * OW), np.float32)
    for co in range(Cout):
        for ci in range(Cin):
            for kh in range(KH):
                for kw in range(KW):
                    for oh in range(OH):
                        for ow in range(OW):
                            ih = oh * stride + kh
                            iw = ow * stride + kw
                            if nhwc_input:
                                in_idx = (ih * W + iw) * Cin + ci
                            else:
                                in_idx = (ci * H + ih) * W + iw
                            out_idx = (co * OH + oh) * OW + ow
                            dense[in_idx, out_idx] = w[co, ci, kh, kw]
    b_dense = np.repeat(b, OH * OW).astype(np.float32)
    return dense, b_dense, OH, OW


def prepare_params(raw):
    """Fold BN, densify convs, pre-transpose to (in,out), pack into slabs.

    Returns (packed, dense_f32):
      packed    -- 3 device arrays consumed by the kernel (d_c1 bf16,
                   w_slab bf16, b_slab f32)
      dense_f32 -- un-packed f32 dense matrices, for a tight correctness check
                   of the densification/folding independent of bf16 rounding.
    """
    wc1, bc1 = _fold_bn_into_conv(raw["w_c1"], raw["b_c1"], raw["bn1"])
    wc2, bc2 = _fold_bn_into_conv(raw["w_c2"], raw["b_c2"], raw["bn2"])
    wc3, bc3 = _fold_bn_into_conv(raw["w_c3"], raw["b_c3"], raw["bn3"])

    d1, bd1, oh, ow = _conv2d_as_dense(wc1, bc1, ROW_COUNT, COL_COUNT, stride=2, nhwc_input=True)
    d2, bd2, oh, ow = _conv2d_as_dense(wc2, bc2, oh, ow, stride=2, nhwc_input=False)
    d3, bd3, oh, ow = _conv2d_as_dense(wc3, bc3, oh, ow, stride=2, nhwc_input=False)
    assert (oh, ow) == (CONV_H, CONV_W)

    w_l3 = np.asarray(raw["w_l3"], np.float32)             # (BIN_MAX_COUNT, LINEAR3_IN)

    dense_f32 = {
        "w_l1": np.asarray(raw["w_l1"], np.float32).T.copy(),
        "b_l1": np.asarray(raw["b_l1"], np.float32).reshape(1, -1),
        "w_l2": np.asarray(raw["w_l2"], np.float32).T.copy(),
        "b_l2": np.asarray(raw["b_l2"], np.float32).reshape(1, -1),
        "d_c1": d1, "b_c1": bd1.reshape(1, -1),
        "d_c2": d2, "b_c2": bd2.reshape(1, -1),
        "d_c3": d3, "b_c3": bd3.reshape(1, -1),
        "w_l3a": w_l3[:, :EMBEDDING_DIM].T.copy(),
        "w_l3b": w_l3[:, EMBEDDING_DIM:].T.copy(),
        "b_l3": np.asarray(raw["b_l3"], np.float32).reshape(1, -1),
    }

    # Pack small matmul weights into one bf16 slab.
    w_slab = np.zeros((W_SLAB_ROWS, W_SLAB_COLS), np.float32)
    for name, (off, rows, cols) in W_SLAB_LAYOUT.items():
        assert dense_f32[name].shape == (rows, cols)
        w_slab[off:off + rows, :cols] = dense_f32[name]

    # Pack all biases into one f32 slab (one bias per row).
    b_slab = np.zeros((B_SLAB_ROWS, B_SLAB_COLS), np.float32)
    for name, (row, cols) in B_SLAB_LAYOUT.items():
        b_slab[row, :cols] = dense_f32[name].reshape(-1)

    packed = {
        "d_c1": jnp.asarray(d1, jnp.bfloat16),
        "w_slab": jnp.asarray(w_slab, jnp.bfloat16),
        "b_slab": jnp.asarray(b_slab, jnp.float32),
    }
    return packed, dense_f32


# ----------------------------------------------------------------------------- raw parameters (PyTorch-style init)
def init_raw_params(key):
    keys = iter(jax.random.split(key, 24))

    def u(fan_in, shape):
        lim = 1.0 / float(fan_in) ** 0.5
        return jax.random.uniform(next(keys), shape, jnp.float32, -lim, lim)

    def bn(c):
        return {
            "gamma": 1.0 + 0.1 * jax.random.normal(next(keys), (c,), jnp.float32),
            "beta": 0.1 * jax.random.normal(next(keys), (c,), jnp.float32),
            "mean": 0.1 * jax.random.normal(next(keys), (c,), jnp.float32),
            "var": jax.random.uniform(next(keys), (c,), jnp.float32, 0.5, 1.5),
        }

    p = {}
    p["w_l1"] = u(BIN_IN, (EMBEDDING_DIM, BIN_IN));         p["b_l1"] = u(BIN_IN, (EMBEDDING_DIM,))
    p["w_l2"] = u(EMBEDDING_DIM, (EMBEDDING_DIM, EMBEDDING_DIM))
    p["b_l2"] = u(EMBEDDING_DIM, (EMBEDDING_DIM,))
    p["w_c1"] = u(2 * 5 * 5, (4, 2, 5, 5));                 p["b_c1"] = u(2 * 5 * 5, (4,))
    p["w_c2"] = u(4 * 3 * 3, (8, 4, 3, 3));                 p["b_c2"] = u(4 * 3 * 3, (8,))
    p["w_c3"] = u(8 * 2 * 2, (8, 8, 2, 2));                 p["b_c3"] = u(8 * 2 * 2, (8,))
    p["bn1"] = bn(4); p["bn2"] = bn(8); p["bn3"] = bn(8)
    p["w_l3"] = u(LINEAR3_IN, (BIN_MAX_COUNT, LINEAR3_IN)); p["b_l3"] = u(LINEAR3_IN, (BIN_MAX_COUNT,))
    return p


# ----------------------------------------------------------------------------- pure-JAX references (for validation)
def reference_forward(raw, bin_info, pallet_info):
    """Straight port of the PyTorch forward (eval-mode BN) in f32."""
    if bin_info.ndim != 3:
        x_bin = bin_info.reshape(1, -1)
    else:
        x_bin = bin_info.reshape(bin_info.shape[0], -1)
    if pallet_info.ndim != 4:
        pallet_info = pallet_info[None]

    x1 = jax.nn.relu(x_bin @ raw["w_l1"].T + raw["b_l1"])
    x1 = jax.nn.relu(x1 @ raw["w_l2"].T + raw["b_l2"])

    xp = jnp.transpose(pallet_info, (0, 3, 1, 2))           # NHWC -> NCHW

    def conv_bn_relu(x, w, b, bn, stride):
        y = jax.lax.conv_general_dilated(
            x, w, window_strides=(stride, stride), padding="VALID",
            dimension_numbers=("NCHW", "OIHW", "NCHW"))
        y = y + b[None, :, None, None]
        scale = bn["gamma"] / jnp.sqrt(bn["var"] + BN_EPS)
        shift = bn["beta"] - bn["mean"] * scale
        return jax.nn.relu(y * scale[None, :, None, None] + shift[None, :, None, None])

    xp = conv_bn_relu(xp, raw["w_c1"], raw["b_c1"], raw["bn1"], 2)
    xp = conv_bn_relu(xp, raw["w_c2"], raw["b_c2"], raw["bn2"], 2)
    xp = conv_bn_relu(xp, raw["w_c3"], raw["b_c3"], raw["bn3"], 2)
    x2 = xp.reshape(xp.shape[0], -1)

    x = jnp.concatenate([x1, x2], axis=1)
    return x @ raw["w_l3"].T + raw["b_l3"]


def densified_forward_f32(d, bin_info, pallet_info):
    """Same math as the kernel but pure-JAX, f32, un-packed.  Validates the
    BN folding + conv densification independently of bf16 rounding."""
    if bin_info.ndim != 3:
        bin_x = bin_info.reshape(1, -1)
    else:
        bin_x = bin_info.reshape(bin_info.shape[0], BIN_IN)
    if pallet_info.ndim != 4:
        pallet_info = pallet_info[None]
    B = bin_x.shape[0]
    pallet_x = pallet_info.reshape(B, ROW_COUNT * COL_COUNT * PALLET_CHANNELS)

    relu = jax.nn.relu
    x1 = relu(bin_x @ d["w_l1"] + d["b_l1"])
    x1 = relu(x1 @ d["w_l2"] + d["b_l2"])
    x2 = relu(pallet_x @ d["d_c1"] + d["b_c1"])
    x2 = relu(x2 @ d["d_c2"] + d["b_c2"])
    x2 = relu(x2 @ d["d_c3"] + d["b_c3"])
    return x1 @ d["w_l3a"] + x2 @ d["w_l3b"] + d["b_l3"]


# ----------------------------------------------------------------------------- main
if __name__ == "__main__":
    key = jax.random.PRNGKey(0)
    pkey, bkey, palkey = jax.random.split(key, 3)

    raw = init_raw_params(pkey)
    packed, dense_f32 = prepare_params(raw)

    B = BATCH_SIZE
    bin_info = jax.random.normal(bkey, (B, BIN_MAX_COUNT, BIN_N_STATE), jnp.float32)
    pallet_info = jax.random.normal(palkey, (B, ROW_COUNT, COL_COUNT, PALLET_CHANNELS), jnp.float32)

    ref = reference_forward(raw, bin_info, pallet_info)

    # Tight f32 check of BN folding + conv densification (no Pallas, no bf16).
    chk = densified_forward_f32(dense_f32, bin_info, pallet_info)
    dense_err = float(jnp.max(jnp.abs(chk - ref)))
    assert dense_err < 1e-3, f"densification mismatch: max abs err = {dense_err}"

    # Fused Pallas kernel (bf16 weights/activations on the MXU).
    q = dqn_forward(packed, bin_info, pallet_info)
    q = jax.block_until_ready(q)

    assert q.shape == (B, BIN_MAX_COUNT)
    assert q.dtype == jnp.float32
    assert bool(jnp.all(jnp.isfinite(q)))

    # Tolerance sized for bf16 matmul rounding (f32 path above is checked tight).
    max_err = float(jnp.max(jnp.abs(q - ref)))
    assert max_err < 5e-2, f"kernel/reference mismatch: max abs err = {max_err}"

    print("KERNEL_OK")
</pallas_src>

<mosaic_0001>
module attributes {stable_mosaic.version = 11 : i64} {
  func.func @_dqn_fused_kernel(%arg0: memref<2x90xf32, #tpu.memory_space<vmem>>, %arg1: memref<2x512xf32, #tpu.memory_space<vmem>>, %arg2: memref<512x144xbf16, #tpu.memory_space<vmem>>, %arg3: memref<352x32xbf16, #tpu.memory_space<vmem>>, %arg4: memref<8x144xf32, #tpu.memory_space<vmem>>, %arg5: memref<2x30xf32, #tpu.memory_space<vmem>>) attributes {dimension_semantics = [], scalar_prefetch = 0 : i64, scratch_operands = 0 : i64, tpu.core_type = #tpu.core_type<tc>} {
    %c0 = arith.constant 0 : index
    %c0_0 = arith.constant 0 : index
    %0 = vector.load %arg0[%c0, %c0_0] : memref<2x90xf32, #tpu.memory_space<vmem>>, vector<2x90xf32>
    %c0_1 = arith.constant 0 : index
    %c0_2 = arith.constant 0 : index
    %1 = vector.load %arg3[%c0_1, %c0_2] : memref<352x32xbf16, #tpu.memory_space<vmem>>, vector<90x32xbf16>
    %c0_3 = arith.constant 0 : index
    %c0_4 = arith.constant 0 : index
    %2 = vector.load %arg4[%c0_3, %c0_4] : memref<8x144xf32, #tpu.memory_space<vmem>>, vector<1x32xf32>
    %3 = arith.truncf %0 : vector<2x90xf32> to vector<2x90xbf16>
    %cst = arith.constant dense<0.000000e+00> : vector<2x32xf32>
    %4 = tpu.matmul %3, %1, %cst {dimension_numbers = #tpu.dot_dimension_numbers<[1], [0], [0], [1], [0, 0, 1, 1], [], []>} : vector<2x90xbf16>, vector<90x32xbf16>, vector<2x32xf32> -> vector<2x32xf32>
    %5 = vector.broadcast %2 : vector<1x32xf32> to vector<2x32xf32>
    %6 = arith.addf %4, %5 : vector<2x32xf32>
    %cst_5 = arith.constant 0.000000e+00 : f32
    %7 = vector.broadcast %cst_5 : f32 to vector<2x32xf32>
    %8 = arith.maximumf %6, %7 : vector<2x32xf32>
    %c96 = arith.constant 96 : index
    %c0_6 = arith.constant 0 : index
    %9 = vector.load %arg3[%c96, %c0_6] : memref<352x32xbf16, #tpu.memory_space<vmem>>, vector<32x32xbf16>
    %c1 = arith.constant 1 : index
    %c0_7 = arith.constant 0 : index
    %10 = vector.load %arg4[%c1, %c0_7] : memref<8x144xf32, #tpu.memory_space<vmem>>, vector<1x32xf32>
    %11 = arith.truncf %8 : vector<2x32xf32> to vector<2x32xbf16>
    %cst_8 = arith.constant dense<0.000000e+00> : vector<2x32xf32>
    %12 = tpu.matmul %11, %9, %cst_8 {dimension_numbers = #tpu.dot_dimension_numbers<[1], [0], [0], [1], [0, 0, 1, 1], [], []>} : vector<2x32xbf16>, vector<32x32xbf16>, vector<2x32xf32> -> vector<2x32xf32>
    %13 = vector.broadcast %10 : vector<1x32xf32> to vector<2x32xf32>
    %14 = arith.addf %12, %13 : vector<2x32xf32>
    %cst_9 = arith.constant 0.000000e+00 : f32
    %15 = vector.broadcast %cst_9 : f32 to vector<2x32xf32>
    %16 = arith.maximumf %14, %15 : vector<2x32xf32>
    %c0_10 = arith.constant 0 : index
    %c0_11 = arith.constant 0 : index
    %17 = vector.load %arg1[%c0_10, %c0_11] : memref<2x512xf32, #tpu.memory_space<vmem>>, vector<2x512xf32>
    %c0_12 = arith.constant 0 : index
    %c0_13 = arith.constant 0 : index
    %18 = vector.load %arg2[%c0_12, %c0_13] : memref<512x144xbf16, #tpu.memory_space<vmem>>, vector<512x144xbf16>
    %c2 = arith.constant 2 : index
    %c0_14 = arith.constant 0 : index
    %19 = vector.load %arg4[%c2, %c0_14] : memref<8x144xf32, #tpu.memory_space<vmem>>, vector<1x144xf32>
    %20 = arith.truncf %17 : vector<2x512xf32> to vector<2x512xbf16>
    %cst_15 = arith.constant dense<0.000000e+00> : vector<2x144xf32>
    %21 = tpu.matmul %20, %18, %cst_15 {dimension_numbers = #tpu.dot_dimension_numbers<[1], [0], [0], [1], [0, 0, 1, 1], [], []>} : vector<2x512xbf16>, vector<512x144xbf16>, vector<2x144xf32> -> vector<2x144xf32>
    %22 = vector.broadcast %19 : vector<1x144xf32> to vector<2x144xf32>
    %23 = arith.addf %21, %22 : vector<2x144xf32>
    %cst_16 = arith.constant 0.000000e+00 : f32
    %24 = vector.broadcast %cst_16 : f32 to vector<2x144xf32>
    %25 = arith.maximumf %23, %24 : vector<2x144xf32>
    %c128 = arith.constant 128 : index
    %c0_17 = arith.constant 0 : index
    %26 = vector.load %arg3[%c128, %c0_17] : memref<352x32xbf16, #tpu.memory_space<vmem>>, vector<144x32xbf16>
    %c3 = arith.constant 3 : index
    %c0_18 = arith.constant 0 : index
    %27 = vector.load %arg4[%c3, %c0_18] : memref<8x144xf32, #tpu.memory_space<vmem>>, vector<1x32xf32>
    %28 = arith.truncf %25 : vector<2x144xf32> to vector<2x144xbf16>
    %cst_19 = arith.constant dense<0.000000e+00> : vector<2x32xf32>
    %29 = tpu.matmul %28, %26, %cst_19 {dimension_numbers = #tpu.dot_dimension_numbers<[1], [0], [0], [1], [0, 0, 1, 1], [], []>} : vector<2x144xbf16>, vector<144x32xbf16>, vector<2x32xf32> -> vector<2x32xf32>
    %30 = vector.broadcast %27 : vector<1x32xf32> to vector<2x32xf32>
    %31 = arith.addf %29, %30 : vector<2x32xf32>
    %cst_20 = arith.constant 0.000000e+00 : f32
    %32 = vector.broadcast %cst_20 : f32 to vector<2x32xf32>
    %33 = arith.maximumf %31, %32 : vector<2x32xf32>
    %c272 = arith.constant 272 : index
    %c0_21 = arith.constant 0 : index
    %34 = vector.load %arg3[%c272, %c0_21] : memref<352x32xbf16, #tpu.memory_space<vmem>>, vector<32x8xbf16>
    %c4 = arith.constant 4 : index
    %c0_22 = arith.constant 0 : index
    %35 = vector.load %arg4[%c4, %c0_22] : memref<8x144xf32, #tpu.memory_space<vmem>>, vector<1x8xf32>
    %36 = arith.truncf %33 : vector<2x32xf32> to vector<2x32xbf16>
    %cst_23 = arith.constant dense<0.000000e+00> : vector<2x8xf32>
    %37 = tpu.matmul %36, %34, %cst_23 {dimension_numbers = #tpu.dot_dimension_numbers<[1], [0], [0], [1], [0, 0, 1, 1], [], []>} : vector<2x32xbf16>, vector<32x8xbf16>, vector<2x8xf32> -> vector<2x8xf32>
    %38 = vector.broadcast %35 : vector<1x8xf32> to vector<2x8xf32>
    %39 = arith.addf %37, %38 : vector<2x8xf32>
    %cst_24 = arith.constant 0.000000e+00 : f32
    %40 = vector.broadcast %cst_24 : f32 to vector<2x8xf32>
    %41 = arith.maximumf %39, %40 : vector<2x8xf32>
    %42 = arith.truncf %16 : vector<2x32xf32> to vector<2x32xbf16>
    %c304 = arith.constant 304 : index
    %c0_25 = arith.constant 0 : index
    %43 = vector.load %arg3[%c304, %c0_25] : memref<352x32xbf16, #tpu.memory_space<vmem>>, vector<32x30xbf16>
    %cst_26 = arith.constant dense<0.000000e+00> : vector<2x30xf32>
    %44 = tpu.matmul %42, %43, %cst_26 {dimension_numbers = #tpu.dot_dimension_numbers<[1], [0], [0], [1], [0, 0, 1, 1], [], []>} : vector<2x32xbf16>, vector<32x30xbf16>, vector<2x30xf32> -> vector<2x30xf32>
    %45 = arith.truncf %41 : vector<2x8xf32> to vector<2x8xbf16>
    %c336 = arith.constant 336 : index
    %c0_27 = arith.constant 0 : index
    %46 = vector.load %arg3[%c336, %c0_27] : memref<352x32xbf16, #tpu.memory_space<vmem>>, vector<8x30xbf16>
    %cst_28 = arith.constant dense<0.000000e+00> : vector<2x30xf32>
    %47 = tpu.matmul %45, %46, %cst_28 {dimension_numbers = #tpu.dot_dimension_numbers<[1], [0], [0], [1], [0, 0, 1, 1], [], []>} : vector<2x8xbf16>, vector<8x30xbf16>, vector<2x30xf32> -> vector<2x30xf32>
    %48 = arith.addf %44, %47 : vector<2x30xf32>
    %c5 = arith.constant 5 : index
    %c0_29 = arith.constant 0 : index
    %49 = vector.load %arg4[%c5, %c0_29] : memref<8x144xf32, #tpu.memory_space<vmem>>, vector<1x30xf32>
    %50 = vector.broadcast %49 : vector<1x30xf32> to vector<2x30xf32>
    %51 = arith.addf %48, %50 : vector<2x30xf32>
    %c0_30 = arith.constant 0 : index
    %c0_31 = arith.constant 0 : index
    %52 = vector.load %arg5[%c0_30, %c0_31] : memref<2x30xf32, #tpu.memory_space<vmem>>, vector<2x30xf32>
    tpu.vector_store %arg5[%c0_30, %c0_31], %51 {strides = array<i32>} : memref<2x30xf32, #tpu.memory_space<vmem>>, vector<2x30xf32>,
    return
  }
}

</mosaic_0001>

<llo_original>
// kernel: dqn_forward.1
$region0: #{dqn_forward.1}
  #allocation0 [shape = 'u32[]', space=smem, size = 0x4, offset = 0x4, fixed_abs, tag = 'smem constant byte address 0x4 - core index']
  #allocation1 [shape = 'u32[144,128]{1,0:T(1,128)}', space=vmem, size = 0x12000, scoped, tag = 'internal scratch']
  %s0 = inlined_call_operand.vmem [shape: f32[2,90], index: 0, kind: input, shape index: {}]
  %s1 = inlined_call_operand.vmem [shape: f32[2,512], index: 1, kind: input, shape index: {}]
  %s2 = inlined_call_operand.vmem [shape: bf16[512,144], index: 2, kind: input, shape index: {}]
  %s3 = inlined_call_operand.vmem [shape: bf16[352,32], index: 3, kind: input, shape index: {}]
  %s4 = inlined_call_operand.vmem [shape: f32[8,144], index: 4, kind: input, shape index: {}]
  %s5 = inlined_call_operand.hbm [shape: f32[2,30], index: 5, kind: output, shape index: {}]
  %s6 = sld [smem:[#allocation0]]
  $region30: #{dqn_forward.1} parent=0
    _
  %s8 = ssub.s32 1, %s6
  %s9 = scalar_select 0, %s8, %s6
  $region1: #{dqn_forward.1} parent=0
    #allocation2 [shape = 'u8[1024]{0}', space=vmem, size = 0x400, scoped, tag = 'output window, operand 0, single buffered']
    #allocation3 [shape = 's32[1]{0}', space=sflag, size = 0x4, scoped, tag = 'scoped memory for dqn_forward.1']
    %10 = vsyncpa [#allocation3], 0
    // Predicated region
    $region2: #{dqn_forward.1} parent=1 // pred_check
      _
    $region3: #{dqn_forward.1} parent=1 // pred_check_branch
      %12 = sbr.rel (0) target = $region5
    $region4: #{dqn_forward.1} parent=1 // pred_region
      _
    $region5: #{dqn_forward.1} parent=1 // pred_fallthru
      _
    // Predicated region
    $region6: #{dqn_forward.1} parent=1 // pred_check
      _
    $region7: #{dqn_forward.1} parent=1 // pred_check_branch
      %14 = sbr.rel (0) target = $region9
    $region8: #{dqn_forward.1} parent=1 // pred_region
      _
    $region9: #{dqn_forward.1} parent=1 // pred_fallthru
      _
    // Predicated region
    $region10: #{dqn_forward.1} parent=1 // pred_check
      _
    $region11: #{dqn_forward.1} parent=1 // pred_check_branch
      %16 = sbr.rel (0) target = $region13
    $region12: #{dqn_forward.1} parent=1 // pred_region
      _
    $region13: #{dqn_forward.1} parent=1 // pred_fallthru
      _
    // Predicated region
    $region14: #{dqn_forward.1} parent=1 // pred_check
      _
    $region15: #{dqn_forward.1} parent=1 // pred_check_branch
      %18 = sbr.rel (0) target = $region17
    $region16: #{dqn_forward.1} parent=1 // pred_region
      _
    $region17: #{dqn_forward.1} parent=1 // pred_fallthru
      _
    // Predicated region
    $region18: #{dqn_forward.1} parent=1 // pred_check
      _
    $region19: #{dqn_forward.1} parent=1 // pred_check_branch
      %20 = sbr.rel (0) target = $region21
    $region20: #{dqn_forward.1} parent=1 // pred_region
      _
    $region21: #{dqn_forward.1} parent=1 // pred_fallthru
      _
    %v22 = vld [vmem:[%s0] sm:$0x3]
    %v23 = vld [vmem:[%s3] sm:$0xf]
    %v24 = vld [vmem:[%s3 + $0x4] sm:$0xf]
    %v25 = vld [vmem:[%s3 + $0x8] sm:$0xf]
    %v26 = vld [vmem:[%s3 + $0xc] sm:$0xf]
    %v27 = vld [vmem:[%s3 + $0x10] sm:$0xf]
    %v28 = vld [vmem:[%s3 + $0x14] sm:$0xf]
    %v29 = vld [vmem:[%s3 + $0x18] sm:$0xf]
    %v30 = vld [vmem:[%s3 + $0x1c] sm:$0xf]
    %v31 = vld [vmem:[%s3 + $0x20] sm:$0xf]
    %v32 = vld [vmem:[%s3 + $0x24] sm:$0xf]
    %v33 = vld [vmem:[%s3 + $0x28] sm:$0xf]
    %v34 = vld [vmem:[%s3 + $0x2c] sm:$0x1]
    %v35 = vld [vmem:[%s4] ss:$0 sm:$0xff]
    %v36 = vpack.c.bf16 %v22, %v22
    %v49 = vunpack.c.l.b16 %v23
    %v50 = vunpack.c.l.b16 %v24
    %v51 = vunpack.c.l.b16 %v25
    %v52 = vunpack.c.l.b16 %v26
    %v53 = vunpack.c.l.b16 %v27
    %v54 = vunpack.c.l.b16 %v28
    %v55 = vunpack.c.l.b16 %v29
    %v56 = vunpack.c.l.b16 %v30
    %v57 = vunpack.c.l.b16 %v31
    %v58 = vunpack.c.l.b16 %v32
    %v59 = vunpack.c.l.b16 %v33
    %v60 = vunpack.c.l.b16 %v34
    %v61 = vpack.c.b16 %v50, %v49
    %v62 = vpack.c.b16 %v52, %v51
    %v63 = vpack.c.b16 %v54, %v53
    %v64 = vpack.c.b16 %v56, %v55
    %v65 = vpack.c.b16 %v58, %v57
    %v66 = vpack.c.b16 %v60, %v59
    %vm72 = vcmask 736256
    %v74 = vsel %vm72, %v36, 0
    %vm76 = vcmask 1044480
    %v78 = vsel %vm76, %v66, 0
    %80 = vmatprep.subr.bf16.mxu0 0
    %81 = vmatpush1.bf16.msra.mxu0 %v61
    %82 = vmatprep.subr.bf16.mxu0 0
    %83 = vmatpush1.bf16.msra.mxu0 %v62
    %84 = vmatprep.subr.bf16.mxu0 0
    %85 = vmatpush1.bf16.msra.mxu0 %v63
    %86 = vmatprep.subr.bf16.mxu0 0
    %87 = vmatpush1.bf16.msra.mxu0 %v64
    %88 = vmatprep.subr.bf16.mxu0 0
    %89 = vmatpush1.bf16.msra.mxu0 %v65
    %90 = vmatprep.subr.bf16.mxu0 0
    %91 = vmatpush1.bf16.msra.mxu0 %v78
    %92 = vmatprep.subr.bf16.mxu0 0
    %93 = vmatpush1.bf16.msra.mxu0 0
    %94 = vmatprep.subr.bf16.mxu0 0
    %95 = vmatpush1.bf16.msra.mxu0 0
    %96 = vmatprep.subr.bf16.mxu0 0
    %97 = vmatpush1.bf16.msra.mxu0 0
    %98 = vmatprep.subr.bf16.mxu0 0
    %99 = vmatpush1.bf16.msra.mxu0 0
    %100 = vmatprep.subr.bf16.mxu0 0
    %101 = vmatpush1.bf16.msra.mxu0 0
    %102 = vmatprep.subr.bf16.mxu0 0
    %103 = vmatpush1.bf16.msra.mxu0 0
    %104 = vmatprep.subr.bf16.mxu0 0
    %105 = vmatpush1.bf16.msra.mxu0 0
    %106 = vmatprep.subr.bf16.mxu0 0
    %107 = vmatpush1.bf16.msra.mxu0 0
    %108 = vmatprep.subr.bf16.mxu0 0
    %109 = vmatpush1.bf16.msra.mxu0 0
    %110 = vmatprep.subr.bf16.mxu0 0
    %111 = vmatpush1.bf16.msra.mxu0 0
    %112 = vmatprep.mubr.bf16.mxu0 0
    %113 = vmatmul.mubr.bf16.gmra.mrb[0].mxu0 %v74
    %v114 = vpop.f32.mrb[0].mxu0
    %v115 = vadd.f32 %v35, %v114
    %v116 = vpop.f32.mrb[0].mxu0
    %v117 = vpop.f32.mrb[0].mxu0
    %v118 = vpop.f32.mrb[0].mxu0
    %119 = vdwg.mxu0
    %v120 = vmax.f32 %v115, 0.0
    %v121 = vld [vmem:[%s3 + $0x30] sm:$0xf]
    %v122 = vld [vmem:[%s3 + $0x34] sm:$0xf]
    %v123 = vld [vmem:[%s3 + $0x38] sm:$0xf]
    %v124 = vld [vmem:[%s3 + $0x3c] sm:$0xf]
    %v125 = vld [vmem:[%s4 + $0x1] ss:$0 sm:$0xff]
    %v126 = vpack.c.bf16 %v120, %v120
    %v131 = vunpack.c.l.b16 %v121
    %v132 = vunpack.c.l.b16 %v122
    %v133 = vunpack.c.l.b16 %v123
    %v134 = vunpack.c.l.b16 %v124
    %v135 = vpack.c.b16 %v132, %v131
    %v136 = vpack.c.b16 %v134, %v133
    %vm139 = vcmask 261120
    %v141 = vsel %vm139, %v126, 0
    %143 = vmatprep.subr.bf16.mxu0 0
    %144 = vmatpush1.bf16.msra.mxu0 %v135
    %145 = vmatprep.subr.bf16.mxu0 0
    %146 = vmatpush1.bf16.msra.mxu0 %v136
    %147 = vmatprep.subr.bf16.mxu0 0
    %148 = vmatpush1.bf16.msra.mxu0 0
    %149 = vmatprep.subr.bf16.mxu0 0
    %150 = vmatpush1.bf16.msra.mxu0 0
    %151 = vmatprep.subr.bf16.mxu0 0
    %152 = vmatpush1.bf16.msra.mxu0 0
    %153 = vmatprep.subr.bf16.mxu0 0
    %154 = vmatpush1.bf16.msra.mxu0 0
    %155 = vmatprep.subr.bf16.mxu0 0
    %156 = vmatpush1.bf16.msra.mxu0 0
    %157 = vmatprep.subr.bf16.mxu0 0
    %158 = vmatpush1.bf16.msra.mxu0 0
    %159 = vmatprep.subr.bf16.mxu0 0
    %160 = vmatpush1.bf16.msra.mxu0 0
    %161 = vmatprep.subr.bf16.mxu0 0
    %162 = vmatpush1.bf16.msra.mxu0 0
    %163 = vmatprep.subr.bf16.mxu0 0
    %164 = vmatpush1.bf16.msra.mxu0 0
    %165 = vmatprep.subr.bf16.mxu0 0
    %166 = vmatpush1.bf16.msra.mxu0 0
    %167 = vmatprep.subr.bf16.mxu0 0
    %168 = vmatpush1.bf16.msra.mxu0 0
    %169 = vmatprep.subr.bf16.mxu0 0
    %170 = vmatpush1.bf16.msra.mxu0 0
    %171 = vmatprep.subr.bf16.mxu0 0
    %172 = vmatpush1.bf16.msra.mxu0 0
    %173 = vmatprep.subr.bf16.mxu0 0
    %174 = vmatpush1.bf16.msra.mxu0 0
    %175 = vmatprep.mubr.bf16.mxu0 0
    %176 = vmatmul.mubr.bf16.gmra.mrb[0].mxu0 %v141
    %v177 = vpop.f32.mrb[0].mxu0
    %v178 = vadd.f32 %v125, %v177
    %v179 = vpop.f32.mrb[0].mxu0
    %v180 = vpop.f32.mrb[0].mxu0
    %v181 = vpop.f32.mrb[0].mxu0
    %182 = vdwg.mxu0
    %v183 = vmax.f32 %v178, 0.0
    %v184 = vld [vmem:[%s1] sm:$0xff]
    %v185 = vld [vmem:[%s2] sm:$0xff]
    %v186 = vld [vmem:[%s2 + $0x8] sm:$0xff]
    %v187 = vld [vmem:[%s2 + $0x10] sm:$0xff]
    %v188 = vld [vmem:[%s2 + $0x18] sm:$0xff]
    %v189 = vld [vmem:[%s2 + $0x20] sm:$0xff]
    %v190 = vld [vmem:[%s2 + $0x28] sm:$0xff]
    %v191 = vld [vmem:[%s2 + $0x30] sm:$0xff]
    %v192 = vld [vmem:[%s2 + $0x38] sm:$0xff]
    %v193 = vld [vmem:[%s2 + $0x40] sm:$0xff]
    %v194 = vld [vmem:[%s2 + $0x48] sm:$0xff]
    %v195 = vld [vmem:[%s2 + $0x50] sm:$0xff]
    %v196 = vld [vmem:[%s2 + $0x58] sm:$0xff]
    %v197 = vld [vmem:[%s2 + $0x60] sm:$0xff]
    %v198 = vld [vmem:[%s2 + $0x68] sm:$0xff]
    %v199 = vld [vmem:[%s2 + $0x70] sm:$0xff]
    %v200 = vld [vmem:[%s2 + $0x78] sm:$0xff]
    %v201 = vld [vmem:[%s2 + $0x80] sm:$0xff]
    %v202 = vld [vmem:[%s2 + $0x88] sm:$0xff]
    %v203 = vld [vmem:[%s2 + $0x90] sm:$0xff]
    %v204 = vld [vmem:[%s2 + $0x98] sm:$0xff]
    %v205 = vld [vmem:[%s2 + $0xa0] sm:$0xff]
    %v206 = vld [vmem:[%s2 + $0xa8] sm:$0xff]
    %v207 = vld [vmem:[%s2 + $0xb0] sm:$0xff]
    %v208 = vld [vmem:[%s2 + $0xb8] sm:$0xff]
    %v209 = vld [vmem:[%s2 + $0xc0] sm:$0xff]
    %v210 = vld [vmem:[%s2 + $0xc8] sm:$0xff]
    %v211 = vld [vmem:[%s2 + $0xd0] sm:$0xff]
    %v212 = vld [vmem:[%s2 + $0xd8] sm:$0xff]
    %v213 = vld [vmem:[%s2 + $0xe0] sm:$0xff]
    %v214 = vld [vmem:[%s2 + $0xe8] sm:$0xff]
    %v215 = vld [vmem:[%s2 + $0xf0] sm:$0xff]
    %v216 = vld [vmem:[%s2 + $0xf8] sm:$0xff]
    %v217 = vld [vmem:[%s2 + $0x100] sm:$0xff]
    %v218 = vld [vmem:[%s2 + $0x108] sm:$0xff]
    %v219 = vld [vmem:[%s2 + $0x110] sm:$0xff]
    %v220 = vld [vmem:[%s2 + $0x118] sm:$0xff]
    %v221 = vld [vmem:[%s2 + $0x120] sm:$0xff]
    %v222 = vld [vmem:[%s2 + $0x128] sm:$0xff]
    %v223 = vld [vmem:[%s2 + $0x130] sm:$0xff]
    %v224 = vld [vmem:[%s2 + $0x138] sm:$0xff]
    %v225 = vld [vmem:[%s2 + $0x140] sm:$0xff]
    %v226 = vld [vmem:[%s2 + $0x148] sm:$0xff]
    %v227 = vld [vmem:[%s2 + $0x150] sm:$0xff]
    %v228 = vld [vmem:[%s2 + $0x158] sm:$0xff]
    %v229 = vld [vmem:[%s2 + $0x160] sm:$0xff]
    %v230 = vld [vmem:[%s2 + $0x168] sm:$0xff]
    %v231 = vld [vmem:[%s2 + $0x170] sm:$0xff]
    %v232 = vld [vmem:[%s2 + $0x178] sm:$0xff]
    %v233 = vld [vmem:[%s2 + $0x180] sm:$0xff]
    %v234 = vld [vmem:[%s2 + $0x188] sm:$0xff]
    %v235 = vld [vmem:[%s2 + $0x190] sm:$0xff]
    %v236 = vld [vmem:[%s2 + $0x198] sm:$0xff]
    %v237 = vld [vmem:[%s2 + $0x1a0] sm:$0xff]
    %v238 = vld [vmem:[%s2 + $0x1a8] sm:$0xff]
    %v239 = vld [vmem:[%s2 + $0x1b0] sm:$0xff]
    %v240 = vld [vmem:[%s2 + $0x1b8] sm:$0xff]
    %v241 = vld [vmem:[%s2 + $0x1c0] sm:$0xff]
    %v242 = vld [vmem:[%s2 + $0x1c8] sm:$0xff]
    %v243 = vld [vmem:[%s2 + $0x1d0] sm:$0xff]
    %v244 = vld [vmem:[%s2 + $0x1d8] sm:$0xff]
    %v245 = vld [vmem:[%s2 + $0x1e0] sm:$0xff]
    %v246 = vld [vmem:[%s2 + $0x1e8] sm:$0xff]
    %v247 = vld [vmem:[%s2 + $0x1f0] sm:$0xff]
    %v248 = vld [vmem:[%s2 + $0x1f8] sm:$0xff]
    %s249 = scalar_lea.vmem %s4, 2
    %v250 = vld [vmem:[%s249] ss:$8 sm:$0x3]
    %v252 = vcombine.high %v184, %v184
    %v254 = vunpack.c.l.s4 1983009808
    %v255 = vunpack.c.0.s8 %v254
    %v256 = vlaneseq
    %v257 = vshrl.u32 %v256, 7
    %v258 = vsub.s32 %v255, %v257
    %v259 = vrot.slane %v184, %v258
    %v261 = vunpack.c.l.s4 1983009808
    %v262 = vunpack.c.0.s8 %v261
    %v263 = vlaneseq
    %v264 = vshrl.u32 %v263, 7
    %v265 = vsub.s32 %v262, %v264
    %v266 = vrot.slane %v252, %v265
    %v267 = vcombine.high %v259, %v259
    %v268 = vcombine.high %v266, %v266
    %v273 = vpack.c.bf16 %v259, %v259
    %v274 = vpack.c.bf16 %v267, %v267
    %v275 = vpack.c.bf16 %v266, %v266
    %v276 = vpack.c.bf16 %v268, %v268
    %v278 = vlaneseq
    %v279 = vshrl.u32 %v278, 7
    %v280 = vsub.s32 0, %v279
    %v281 = vrot.slane %v250, %v280
    %v282 = vlaneseq
    %v283 = vshrl.u32 %v282, 7
    %v284 = vsub.s32 1, %v283
    %v285 = vrot.slane %v250, %v284
    %v352 = vunpack.c.l.b16 %v185
    %v353 = vunpack.c.h.b16 %v185
    %v354 = vunpack.c.l.b16 %v186
    %v355 = vunpack.c.h.b16 %v186
    %v356 = vunpack.c.l.b16 %v187
    %v357 = vunpack.c.h.b16 %v187
    %v358 = vunpack.c.l.b16 %v188
    %v359 = vunpack.c.h.b16 %v188
    %v360 = vunpack.c.l.b16 %v189
    %v361 = vunpack.c.h.b16 %v189
    %v362 = vunpack.c.l.b16 %v190
    %v363 = vunpack.c.h.b16 %v190
    %v364 = vunpack.c.l.b16 %v191
    %v365 = vunpack.c.h.b16 %v191
    %v366 = vunpack.c.l.b16 %v192
    %v367 = vunpack.c.h.b16 %v192
    %v368 = vunpack.c.l.b16 %v193
    %v369 = vunpack.c.h.b16 %v193
    %v370 = vunpack.c.l.b16 %v194
    %v371 = vunpack.c.h.b16 %v194
    %v372 = vunpack.c.l.b16 %v195
    %v373 = vunpack.c.h.b16 %v195
    %v374 = vunpack.c.l.b16 %v196
    %v375 = vunpack.c.h.b16 %v196
    %v376 = vunpack.c.l.b16 %v197
    %v377 = vunpack.c.h.b16 %v197
    %v378 = vunpack.c.l.b16 %v198
    %v379 = vunpack.c.h.b16 %v198
    %v380 = vunpack.c.l.b16 %v199
    %v381 = vunpack.c.h.b16 %v199
    %v382 = vunpack.c.l.b16 %v200
    %v383 = vunpack.c.h.b16 %v200
    %v384 = vunpack.c.l.b16 %v201
    %v385 = vunpack.c.h.b16 %v201
    %v386 = vunpack.c.l.b16 %v202
    %v387 = vunpack.c.h.b16 %v202
    %v388 = vunpack.c.l.b16 %v203
    %v389 = vunpack.c.h.b16 %v203
    %v390 = vunpack.c.l.b16 %v204
    %v391 = vunpack.c.h.b16 %v204
    %v392 = vunpack.c.l.b16 %v205
    %v393 = vunpack.c.h.b16 %v205
    %v394 = vunpack.c.l.b16 %v206
    %v395 = vunpack.c.h.b16 %v206
    %v396 = vunpack.c.l.b16 %v207
    %v397 = vunpack.c.h.b16 %v207
    %v398 = vunpack.c.l.b16 %v208
    %v399 = vunpack.c.h.b16 %v208
    %v400 = vunpack.c.l.b16 %v209
    %v401 = vunpack.c.h.b16 %v209
    %v402 = vunpack.c.l.b16 %v210
    %v403 = vunpack.c.h.b16 %v210
    %v404 = vunpack.c.l.b16 %v211
    %v405 = vunpack.c.h.b16 %v211
    %v406 = vunpack.c.l.b16 %v212
    %v407 = vunpack.c.h.b16 %v212
    %v408 = vunpack.c.l.b16 %v213
    %v409 = vunpack.c.h.b16 %v213
    %v410 = vunpack.c.l.b16 %v214
    %v411 = vunpack.c.h.b16 %v214
    %v412 = vunpack.c.l.b16 %v215
    %v413 = vunpack.c.h.b16 %v215
    %v414 = vunpack.c.l.b16 %v216
    %v415 = vunpack.c.h.b16 %v216
    %v416 = vunpack.c.l.b16 %v217
    %v417 = vunpack.c.h.b16 %v217
    %v418 = vunpack.c.l.b16 %v218
    %v419 = vunpack.c.h.b16 %v218
    %v420 = vunpack.c.l.b16 %v219
    %v421 = vunpack.c.h.b16 %v219
    %v422 = vunpack.c.l.b16 %v220
    %v423 = vunpack.c.h.b16 %v220
    %v424 = vunpack.c.l.b16 %v221
    %v425 = vunpack.c.h.b16 %v221
    %v426 = vunpack.c.l.b16 %v222
    %v427 = vunpack.c.h.b16 %v222
    %v428 = vunpack.c.l.b16 %v223
    %v429 = vunpack.c.h.b16 %v223
    %v430 = vunpack.c.l.b16 %v224
    %v431 = vunpack.c.h.b16 %v224
    %v432 = vunpack.c.l.b16 %v225
    %v433 = vunpack.c.h.b16 %v225
    %v434 = vunpack.c.l.b16 %v226
    %v435 = vunpack.c.h.b16 %v226
    %v436 = vunpack.c.l.b16 %v227
    %v437 = vunpack.c.h.b16 %v227
    %v438 = vunpack.c.l.b16 %v228
    %v439 = vunpack.c.h.b16 %v228
    %v440 = vunpack.c.l.b16 %v229
    %v441 = vunpack.c.h.b16 %v229
    %v442 = vunpack.c.l.b16 %v230
    %v443 = vunpack.c.h.b16 %v230
    %v444 = vunpack.c.l.b16 %v231
    %v445 = vunpack.c.h.b16 %v231
    %v446 = vunpack.c.l.b16 %v232
    %v447 = vunpack.c.h.b16 %v232
    %v448 = vunpack.c.l.b16 %v233
    %v449 = vunpack.c.h.b16 %v233
    %v450 = vunpack.c.l.b16 %v234
    %v451 = vunpack.c.h.b16 %v234
    %v452 = vunpack.c.l.b16 %v235
    %v453 = vunpack.c.h.b16 %v235
    %v454 = vunpack.c.l.b16 %v236
    %v455 = vunpack.c.h.b16 %v236
    %v456 = vunpack.c.l.b16 %v237
    %v457 = vunpack.c.h.b16 %v237
    %v458 = vunpack.c.l.b16 %v238
    %v459 = vunpack.c.h.b16 %v238
    %v460 = vunpack.c.l.b16 %v239
    %v461 = vunpack.c.h.b16 %v239
    %v462 = vunpack.c.l.b16 %v240
    %v463 = vunpack.c.h.b16 %v240
    %v464 = vunpack.c.l.b16 %v241
    %v465 = vunpack.c.h.b16 %v241
    %v466 = vunpack.c.l.b16 %v242
    %v467 = vunpack.c.h.b16 %v242
    %v468 = vunpack.c.l.b16 %v243
    %v469 = vunpack.c.h.b16 %v243
    %v470 = vunpack.c.l.b16 %v244
    %v471 = vunpack.c.h.b16 %v244
    %v472 = vunpack.c.l.b16 %v245
    %v473 = vunpack.c.h.b16 %v245
    %v474 = vunpack.c.l.b16 %v246
    %v475 = vunpack.c.h.b16 %v246
    %v476 = vunpack.c.l.b16 %v247
    %v477 = vunpack.c.h.b16 %v247
    %v478 = vunpack.c.l.b16 %v248
    %v479 = vunpack.c.h.b16 %v248
    %v480 = vpack.c.b16 %v354, %v352
    %v481 = vpack.c.b16 %v355, %v353
    %v482 = vpack.c.b16 %v358, %v356
    %v483 = vpack.c.b16 %v359, %v357
    %v484 = vpack.c.b16 %v362, %v360
    %v485 = vpack.c.b16 %v363, %v361
    %v486 = vpack.c.b16 %v366, %v364
    %v487 = vpack.c.b16 %v367, %v365
    %v488 = vpack.c.b16 %v370, %v368
    %v489 = vpack.c.b16 %v371, %v369
    %v490 = vpack.c.b16 %v374, %v372
    %v491 = vpack.c.b16 %v375, %v373
    %v492 = vpack.c.b16 %v378, %v376
    %v493 = vpack.c.b16 %v379, %v377
    %v494 = vpack.c.b16 %v382, %v380
    %v495 = vpack.c.b16 %v383, %v381
    %v496 = vpack.c.b16 %v386, %v384
    %v497 = vpack.c.b16 %v387, %v385
    %v498 = vpack.c.b16 %v390, %v388
    %v499 = vpack.c.b16 %v391, %v389
    %v500 = vpack.c.b16 %v394, %v392
    %v501 = vpack.c.b16 %v395, %v393
    %v502 = vpack.c.b16 %v398, %v396
    %v503 = vpack.c.b16 %v399, %v397
    %v504 = vpack.c.b16 %v402, %v400
    %v505 = vpack.c.b16 %v403, %v401
    %v506 = vpack.c.b16 %v406, %v404
    %v507 = vpack.c.b16 %v407, %v405
    %v508 = vpack.c.b16 %v410, %v408
    %v509 = vpack.c.b16 %v411, %v409
    %v510 = vpack.c.b16 %v414, %v412
    %v511 = vpack.c.b16 %v415, %v413
    %v512 = vpack.c.b16 %v418, %v416
    %v513 = vpack.c.b16 %v419, %v417
    %v514 = vpack.c.b16 %v422, %v420
    %v515 = vpack.c.b16 %v423, %v421
    %v516 = vpack.c.b16 %v426, %v424
    %v517 = vpack.c.b16 %v427, %v425
    %v518 = vpack.c.b16 %v430, %v428
    %v519 = vpack.c.b16 %v431, %v429
    %v520 = vpack.c.b16 %v434, %v432
    %v521 = vpack.c.b16 %v435, %v433
    %v522 = vpack.c.b16 %v438, %v436
    %v523 = vpack.c.b16 %v439, %v437
    %v524 = vpack.c.b16 %v442, %v440
    %v525 = vpack.c.b16 %v443, %v441
    %v526 = vpack.c.b16 %v446, %v444
    %v527 = vpack.c.b16 %v447, %v445
    %v528 = vpack.c.b16 %v450, %v448
    %v529 = vpack.c.b16 %v451, %v449
    %v530 = vpack.c.b16 %v454, %v452
    %v531 = vpack.c.b16 %v455, %v453
    %v532 = vpack.c.b16 %v458, %v456
    %v533 = vpack.c.b16 %v459, %v457
    %v534 = vpack.c.b16 %v462, %v460
    %v535 = vpack.c.b16 %v463, %v461
    %v536 = vpack.c.b16 %v466, %v464
    %v537 = vpack.c.b16 %v467, %v465
    %v538 = vpack.c.b16 %v470, %v468
    %v539 = vpack.c.b16 %v471, %v469
    %v540 = vpack.c.b16 %v474, %v472
    %v541 = vpack.c.b16 %v475, %v473
    %v542 = vpack.c.b16 %v478, %v476
    %v543 = vpack.c.b16 %v479, %v477
    %608 = vmatprep.subr.bf16.mxu0 %v481
    %609 = vmatpush1.bf16.msra.mxu0 %v480
    %610 = vmatprep.subr.bf16.mxu0 %v483
    %611 = vmatpush1.bf16.msra.mxu0 %v482
    %612 = vmatprep.subr.bf16.mxu0 %v485
    %613 = vmatpush1.bf16.msra.mxu0 %v484
    %614 = vmatprep.subr.bf16.mxu0 %v487
    %615 = vmatpush1.bf16.msra.mxu0 %v486
    %616 = vmatprep.subr.bf16.mxu0 %v489
    %617 = vmatpush1.bf16.msra.mxu0 %v488
    %618 = vmatprep.subr.bf16.mxu0 %v491
    %619 = vmatpush1.bf16.msra.mxu0 %v490
    %620 = vmatprep.subr.bf16.mxu0 %v493
    %621 = vmatpush1.bf16.msra.mxu0 %v492
    %622 = vmatprep.subr.bf16.mxu0 %v495
    %623 = vmatpush1.bf16.msra.mxu0 %v494
    %624 = vmatprep.subr.bf16.mxu0 %v497
    %625 = vmatpush1.bf16.msra.mxu0 %v496
    %626 = vmatprep.subr.bf16.mxu0 %v499
    %627 = vmatpush1.bf16.msra.mxu0 %v498
    %628 = vmatprep.subr.bf16.mxu0 %v501
    %629 = vmatpush1.bf16.msra.mxu0 %v500
    %630 = vmatprep.subr.bf16.mxu0 %v503
    %631 = vmatpush1.bf16.msra.mxu0 %v502
    %632 = vmatprep.subr.bf16.mxu0 %v505
    %633 = vmatpush1.bf16.msra.mxu0 %v504
    %634 = vmatprep.subr.bf16.mxu0 %v507
    %635 = vmatpush1.bf16.msra.mxu0 %v506
    %636 = vmatprep.subr.bf16.mxu0 %v509
    %637 = vmatpush1.bf16.msra.mxu0 %v508
    %638 = vmatprep.subr.bf16.mxu0 %v511
    %639 = vmatpush1.bf16.msra.mxu0 %v510
    %640 = vmatprep.mubr.bf16.mxu0 %v274
    %641 = vmatmul.mubr.bf16.gmra.mrb[0].mxu0 %v273
    %v642 = vpop.f32.mrb[0].mxu0
    %v643 = vadd.f32 %v281, %v642
    %v644 = vpop.f32.mrb[0].mxu0
    %v645 = vadd.f32 %v285, %v644
    %v646 = vpop.f32.mrb[0].mxu0
    %v647 = vpop.f32.mrb[0].mxu0
    %648 = vdwg.mxu0
    %649 = vmatprep.subr.bf16.mxu0 %v513
    %650 = vmatpush1.bf16.msra.mxu0 %v512
    %651 = vmatprep.subr.bf16.mxu0 %v515
    %652 = vmatpush1.bf16.msra.mxu0 %v514
    %653 = vmatprep.subr.bf16.mxu0 %v517
    %654 = vmatpush1.bf16.msra.mxu0 %v516
    %655 = vmatprep.subr.bf16.mxu0 %v519
    %656 = vmatpush1.bf16.msra.mxu0 %v518
    %657 = vmatprep.subr.bf16.mxu0 %v521
    %658 = vmatpush1.bf16.msra.mxu0 %v520
    %659 = vmatprep.subr.bf16.mxu0 %v523
    %660 = vmatpush1.bf16.msra.mxu0 %v522
    %661 = vmatprep.subr.bf16.mxu0 %v525
    %662 = vmatpush1.bf16.msra.mxu0 %v524
    %663 = vmatprep.subr.bf16.mxu0 %v527
    %664 = vmatpush1.bf16.msra.mxu0 %v526
    %665 = vmatprep.subr.bf16.mxu0 %v529
    %666 = vmatpush1.bf16.msra.mxu0 %v528
    %667 = vmatprep.subr.bf16.mxu0 %v531
    %668 = vmatpush1.bf16.msra.mxu0 %v530
    %669 = vmatprep.subr.bf16.mxu0 %v533
    %670 = vmatpush1.bf16.msra.mxu0 %v532
    %671 = vmatprep.subr.bf16.mxu0 %v535
    %672 = vmatpush1.bf16.msra.mxu0 %v534
    %673 = vmatprep.subr.bf16.mxu0 %v537
    %674 = vmatpush1.bf16.msra.mxu0 %v536
    %675 = vmatprep.subr.bf16.mxu0 %v539
    %676 = vmatpush1.bf16.msra.mxu0 %v538
    %677 = vmatprep.subr.bf16.mxu0 %v541
    %678 = vmatpush1.bf16.msra.mxu0 %v540
    %679 = vmatprep.subr.bf16.mxu0 %v543
    %680 = vmatpush1.bf16.msra.mxu0 %v542
    %681 = vmatprep.mubr.bf16.mxu0 %v276
    %682 = vmatmul.mubr.bf16.gmra.mrb[0].mxu0 %v275
    %v683 = vpop.f32.mrb[0].mxu0
    %v684 = vadd.f32 %v643, %v683
    %v685 = vpop.f32.mrb[0].mxu0
    %v686 = vadd.f32 %v645, %v685
    %v687 = vpop.f32.mrb[0].mxu0
    %v688 = vpop.f32.mrb[0].mxu0
    %689 = vdwg.mxu0
    %v690 = vmax.f32 %v684, 0.0
    %v691 = vmax.f32 %v686, 0.0
    %v692 = vld [vmem:[%s3 + $0x40] sm:$0xf]
    %v693 = vld [vmem:[%s3 + $0x44] sm:$0xf]
    %v694 = vld [vmem:[%s3 + $0x48] sm:$0xf]
    %v695 = vld [vmem:[%s3 + $0x4c] sm:$0xf]
    %v696 = vld [vmem:[%s3 + $0x50] sm:$0xf]
    %v697 = vld [vmem:[%s3 + $0x54] sm:$0xf]
    %v698 = vld [vmem:[%s3 + $0x58] sm:$0xf]
    %v699 = vld [vmem:[%s3 + $0x5c] sm:$0xf]
    %v700 = vld [vmem:[%s3 + $0x60] sm:$0xf]
    %v701 = vld [vmem:[%s3 + $0x64] sm:$0xf]
    %v702 = vld [vmem:[%s3 + $0x68] sm:$0xf]
    %v703 = vld [vmem:[%s3 + $0x6c] sm:$0xf]
    %v704 = vld [vmem:[%s3 + $0x70] sm:$0xf]
    %v705 = vld [vmem:[%s3 + $0x74] sm:$0xf]
    %v706 = vld [vmem:[%s3 + $0x78] sm:$0xf]
    %v707 = vld [vmem:[%s3 + $0x7c] sm:$0xf]
    %v708 = vld [vmem:[%s3 + $0x80] sm:$0xf]
    %v709 = vld [vmem:[%s3 + $0x84] sm:$0xf]
    %v710 = vld [vmem:[%s4 + $0x3] ss:$0 sm:$0xff]
    %v711 = vpack.c.bf16 %v690, %v690
    %v712 = vpack.c.bf16 %v691, %v691
    %v731 = vunpack.c.l.b16 %v692
    %v732 = vunpack.c.l.b16 %v693
    %v733 = vunpack.c.l.b16 %v694
    %v734 = vunpack.c.l.b16 %v695
    %v735 = vunpack.c.l.b16 %v696
    %v736 = vunpack.c.l.b16 %v697
    %v737 = vunpack.c.l.b16 %v698
    %v738 = vunpack.c.l.b16 %v699
    %v739 = vunpack.c.l.b16 %v700
    %v740 = vunpack.c.l.b16 %v701
    %v741 = vunpack.c.l.b16 %v702
    %v742 = vunpack.c.l.b16 %v703
    %v743 = vunpack.c.l.b16 %v704
    %v744 = vunpack.c.l.b16 %v705
    %v745 = vunpack.c.l.b16 %v706
    %v746 = vunpack.c.l.b16 %v707
    %v747 = vunpack.c.l.b16 %v708
    %v748 = vunpack.c.l.b16 %v709
    %v749 = vpack.c.b16 %v732, %v731
    %v750 = vpack.c.b16 %v734, %v733
    %v751 = vpack.c.b16 %v736, %v735
    %v752 = vpack.c.b16 %v738, %v737
    %v753 = vpack.c.b16 %v740, %v739
    %v754 = vpack.c.b16 %v742, %v741
    %v755 = vpack.c.b16 %v744, %v743
    %v756 = vpack.c.b16 %v746, %v745
    %v757 = vpack.c.b16 %v748, %v747
    %vm767 = vcmask 130048
    %v769 = vsel %vm767, %v712, 0
    %771 = vmatprep.subr.bf16.mxu0 0
    %772 = vmatpush1.bf16.msra.mxu0 %v749
    %773 = vmatprep.subr.bf16.mxu0 0
    %774 = vmatpush1.bf16.msra.mxu0 %v750
    %775 = vmatprep.subr.bf16.mxu0 0
    %776 = vmatpush1.bf16.msra.mxu0 %v751
    %777 = vmatprep.subr.bf16.mxu0 0
    %778 = vmatpush1.bf16.msra.mxu0 %v752
    %779 = vmatprep.subr.bf16.mxu0 0
    %780 = vmatpush1.bf16.msra.mxu0 %v753
    %781 = vmatprep.subr.bf16.mxu0 0
    %782 = vmatpush1.bf16.msra.mxu0 %v754
    %783 = vmatprep.subr.bf16.mxu0 0
    %784 = vmatpush1.bf16.msra.mxu0 %v755
    %785 = vmatprep.subr.bf16.mxu0 0
    %786 = vmatpush1.bf16.msra.mxu0 %v756
    %787 = vmatprep.subr.bf16.mxu0 0
    %788 = vmatpush1.bf16.msra.mxu0 %v757
    %789 = vmatprep.subr.bf16.mxu0 0
    %790 = vmatpush1.bf16.msra.mxu0 0
    %791 = vmatprep.subr.bf16.mxu0 0
    %792 = vmatpush1.bf16.msra.mxu0 0
    %793 = vmatprep.subr.bf16.mxu0 0
    %794 = vmatpush1.bf16.msra.mxu0 0
    %795 = vmatprep.subr.bf16.mxu0 0
    %796 = vmatpush1.bf16.msra.mxu0 0
    %797 = vmatprep.subr.bf16.mxu0 0
    %798 = vmatpush1.bf16.msra.mxu0 0
    %799 = vmatprep.subr.bf16.mxu0 0
    %800 = vmatpush1.bf16.msra.mxu0 0
    %801 = vmatprep.subr.bf16.mxu0 0
    %802 = vmatpush1.bf16.msra.mxu0 0
    %803 = vmatprep.mubr.bf16.mxu0 %v769
    %804 = vmatmul.mubr.bf16.gmra.mrb[0].mxu0 %v711
    %v805 = vpop.f32.mrb[0].mxu0
    %v806 = vadd.f32 %v710, %v805
    %v807 = vpop.f32.mrb[0].mxu0
    %v808 = vpop.f32.mrb[0].mxu0
    %v809 = vpop.f32.mrb[0].mxu0
    %810 = vdwg.mxu0
    %v811 = vmax.f32 %v806, 0.0
    %v812 = vld [vmem:[%s3 + $0x88] sm:$0xf]
    %v813 = vld [vmem:[%s3 + $0x8c] sm:$0xf]
    %v814 = vld [vmem:[%s3 + $0x90] sm:$0xf]
    %v815 = vld [vmem:[%s3 + $0x94] sm:$0xf]
    %v816 = vld [vmem:[%s4 + $0x4] ss:$0 sm:$0xff]
    %v817 = vpack.c.bf16 %v811, %v811
    %v822 = vunpack.c.l.b16 %v812
    %v823 = vunpack.c.l.b16 %v813
    %v824 = vunpack.c.l.b16 %v814
    %v825 = vunpack.c.l.b16 %v815
    %v826 = vpack.c.b16 %v823, %v822
    %v827 = vpack.c.b16 %v825, %v824
    %v831 = vsel %vm139, %v817, 0
    %833 = vmatprep.subr.bf16.mxu0 0
    %834 = vmatpush1.bf16.msra.mxu0 %v826
    %835 = vmatprep.subr.bf16.mxu0 0
    %836 = vmatpush1.bf16.msra.mxu0 %v827
    %837 = vmatprep.subr.bf16.mxu0 0
    %838 = vmatpush1.bf16.msra.mxu0 0
    %839 = vmatprep.subr.bf16.mxu0 0
    %840 = vmatpush1.bf16.msra.mxu0 0
    %841 = vmatprep.subr.bf16.mxu0 0
    %842 = vmatpush1.bf16.msra.mxu0 0
    %843 = vmatprep.subr.bf16.mxu0 0
    %844 = vmatpush1.bf16.msra.mxu0 0
    %845 = vmatprep.subr.bf16.mxu0 0
    %846 = vmatpush1.bf16.msra.mxu0 0
    %847 = vmatprep.subr.bf16.mxu0 0
    %848 = vmatpush1.bf16.msra.mxu0 0
    %849 = vmatprep.subr.bf16.mxu0 0
    %850 = vmatpush1.bf16.msra.mxu0 0
    %851 = vmatprep.subr.bf16.mxu0 0
    %852 = vmatpush1.bf16.msra.mxu0 0
    %853 = vmatprep.subr.bf16.mxu0 0
    %854 = vmatpush1.bf16.msra.mxu0 0
    %855 = vmatprep.subr.bf16.mxu0 0
    %856 = vmatpush1.bf16.msra.mxu0 0
    %857 = vmatprep.subr.bf16.mxu0 0
    %858 = vmatpush1.bf16.msra.mxu0 0
    %859 = vmatprep.subr.bf16.mxu0 0
    %860 = vmatpush1.bf16.msra.mxu0 0
    %861 = vmatprep.subr.bf16.mxu0 0
    %862 = vmatpush1.bf16.msra.mxu0 0
    %863 = vmatprep.subr.bf16.mxu0 0
    %864 = vmatpush1.bf16.msra.mxu0 0
    %865 = vmatprep.mubr.bf16.mxu0 0
    %866 = vmatmul.mubr.bf16.gmra.mrb[0].mxu0 %v831
    %v867 = vpop.f32.mrb[0].mxu0
    %v868 = vadd.f32 %v816, %v867
    %v869 = vpop.f32.mrb[0].mxu0
    %v870 = vpop.f32.mrb[0].mxu0
    %v871 = vpop.f32.mrb[0].mxu0
    %872 = vdwg.mxu0
    %v873 = vmax.f32 %v868, 0.0
    %v874 = vpack.c.bf16 %v183, %v183
    %v875 = vld [vmem:[%s3 + $0x98] sm:$0xf]
    %v876 = vld [vmem:[%s3 + $0x9c] sm:$0xf]
    %v877 = vld [vmem:[%s3 + $0xa0] sm:$0xf]
    %v878 = vld [vmem:[%s3 + $0xa4] sm:$0xf]
    %v879 = vpack.c.bf16 %v873, %v873
    %v880 = vld [vmem:[%s3 + $0xa8] sm:$0xf]
    %vm881 = vcmask 64512
    %v883 = vsel %vm881, %v879, 0
    %vm885 = vcmask 1043456
    %v887 = vsel %vm885, %v880, 0
    %889 = vmatprep.subr.bf16.mxu0 0
    %890 = vmatpush1.bf16.msra.mxu0 %v887
    %891 = vmatprep.subr.bf16.mxu0 0
    %892 = vmatpush1.bf16.msra.mxu0 0
    %893 = vmatprep.subr.bf16.mxu0 0
    %894 = vmatpush1.bf16.msra.mxu0 0
    %895 = vmatprep.subr.bf16.mxu0 0
    %896 = vmatpush1.bf16.msra.mxu0 0
    %897 = vmatprep.subr.bf16.mxu0 0
    %898 = vmatpush1.bf16.msra.mxu0 0
    %899 = vmatprep.subr.bf16.mxu0 0
    %900 = vmatpush1.bf16.msra.mxu0 0
    %901 = vmatprep.subr.bf16.mxu0 0
    %902 = vmatpush1.bf16.msra.mxu0 0
    %903 = vmatprep.subr.bf16.mxu0 0
    %904 = vmatpush1.bf16.msra.mxu0 0
    %905 = vmatprep.subr.bf16.mxu0 0
    %906 = vmatpush1.bf16.msra.mxu0 0
    %907 = vmatprep.subr.bf16.mxu0 0
    %908 = vmatpush1.bf16.msra.mxu0 0
    %909 = vmatprep.subr.bf16.mxu0 0
    %910 = vmatpush1.bf16.msra.mxu0 0
    %911 = vmatprep.subr.bf16.mxu0 0
    %912 = vmatpush1.bf16.msra.mxu0 0
    %913 = vmatprep.subr.bf16.mxu0 0
    %914 = vmatpush1.bf16.msra.mxu0 0
    %915 = vmatprep.subr.bf16.mxu0 0
    %916 = vmatpush1.bf16.msra.mxu0 0
    %917 = vmatprep.subr.bf16.mxu0 0
    %918 = vmatpush1.bf16.msra.mxu0 0
    %919 = vmatprep.subr.bf16.mxu0 0
    %920 = vmatpush1.bf16.msra.mxu0 0
    %921 = vmatprep.mubr.bf16.mxu0 0
    %922 = vmatmul.mubr.bf16.gmra.mrb[0].mxu0 %v883
    %v923 = vpop.f32.mrb[0].mxu0
    %v924 = vadd.f32 0.0, %v923
    %v925 = vpop.f32.mrb[0].mxu0
    %v926 = vpop.f32.mrb[0].mxu0
    %v927 = vpop.f32.mrb[0].mxu0
    %928 = vdwg.mxu0
    %v933 = vunpack.c.l.b16 %v875
    %v934 = vunpack.c.l.b16 %v876
    %v935 = vunpack.c.l.b16 %v877
    %v936 = vunpack.c.l.b16 %v878
    %v937 = vpack.c.b16 %v934, %v933
    %v938 = vpack.c.b16 %v936, %v935
    %v942 = vsel %vm139, %v874, 0
    %944 = vmatprep.subr.bf16.mxu0 0
    %945 = vmatpush1.bf16.msra.mxu0 %v937
    %946 = vmatprep.subr.bf16.mxu0 0
    %947 = vmatpush1.bf16.msra.mxu0 %v938
    %948 = vmatprep.subr.bf16.mxu0 0
    %949 = vmatpush1.bf16.msra.mxu0 0
    %950 = vmatprep.subr.bf16.mxu0 0
    %951 = vmatpush1.bf16.msra.mxu0 0
    %952 = vmatprep.subr.bf16.mxu0 0
    %953 = vmatpush1.bf16.msra.mxu0 0
    %954 = vmatprep.subr.bf16.mxu0 0
    %955 = vmatpush1.bf16.msra.mxu0 0
    %956 = vmatprep.subr.bf16.mxu0 0
    %957 = vmatpush1.bf16.msra.mxu0 0
    %958 = vmatprep.subr.bf16.mxu0 0
    %959 = vmatpush1.bf16.msra.mxu0 0
    %960 = vmatprep.subr.bf16.mxu0 0
    %961 = vmatpush1.bf16.msra.mxu0 0
    %962 = vmatprep.subr.bf16.mxu0 0
    %963 = vmatpush1.bf16.msra.mxu0 0
    %964 = vmatprep.subr.bf16.mxu0 0
    %965 = vmatpush1.bf16.msra.mxu0 0
    %966 = vmatprep.subr.bf16.mxu0 0
    %967 = vmatpush1.bf16.msra.mxu0 0
    %968 = vmatprep.subr.bf16.mxu0 0
    %969 = vmatpush1.bf16.msra.mxu0 0
    %970 = vmatprep.subr.bf16.mxu0 0
    %971 = vmatpush1.bf16.msra.mxu0 0
    %972 = vmatprep.subr.bf16.mxu0 0
    %973 = vmatpush1.bf16.msra.mxu0 0
    %974 = vmatprep.subr.bf16.mxu0 0
    %975 = vmatpush1.bf16.msra.mxu0 0
    %976 = vmatprep.mubr.bf16.mxu0 0
    %977 = vmatmul.mubr.bf16.gmra.mrb[0].mxu0 %v942
    %v978 = vpop.f32.mrb[0].mxu0
    %v979 = vadd.f32 %v924, %v978
    %v980 = vpop.f32.mrb[0].mxu0
    %v981 = vpop.f32.mrb[0].mxu0
    %v982 = vpop.f32.mrb[0].mxu0
    %983 = vdwg.mxu0
    %v984 = vld [vmem:[%s4 + $0x5] ss:$0 sm:$0xff]
    %v985 = vadd.f32 %v979, %v984
    %vm986 = vcmask 238592
    %987 = vst.msk [vmem:[#allocation2] sm:$0x3] %vm986, %v985
    // Predicated region
    $region22: #{dqn_forward.1} parent=1 // pred_check
      _
    $region23: #{dqn_forward.1} parent=1 // pred_check_branch
      %989 = sbr.rel (0) target = $region25
    $region24: #{dqn_forward.1} parent=1 // pred_region
      %s991 = ssub.s32 32, 32
      %992 = vsyncadd [#allocation3], %s991
      %s994 = sshll.u32 [#allocation2], 4
      %s995 = int_to_ptr.vmem [resolvable:$true] %s994
      %997 = dma.vmem_to_hbm [thread:$0]  %s995, 32, %s5, [#allocation3]
    $region25: #{dqn_forward.1} parent=1 // pred_fallthru
      _
    // Predicated region
    $region26: #{dqn_forward.1} parent=1 // pred_check
      _
    $region27: #{dqn_forward.1} parent=1 // pred_check_branch
      %999 = sbr.rel (0) target = $region29
    $region28: #{dqn_forward.1} parent=1 // pred_region
      %1000 = dma.done [#allocation3], 32
    $region29: #{dqn_forward.1} parent=1 // pred_fallthru
      _
    %1001 = vsyncpa [#allocation3], 1

</llo_original>
